<compile_context>
chip_gen: v7x
topology: tpu7x:2x2x1
jax: 0.10.0
libtpu: 0.0.40
codegen_flags: <defaults>
</compile_context>

<pallas_src>
import functools

import jax
import jax.numpy as jnp
from jax.experimental import pallas as pl
from jax.experimental.pallas import tpu as pltpu


def causal_conv1d(x, weight, bias, *, stride, dilation, padding, causal=True,
                  compute_dtype=jnp.bfloat16, tile_l=1024):
    """Equivalent of Conv(nn.Conv1d(...), Chomp1d(padding)).forward."""
    N, C_in, L = x.shape
    C_out, C_in_w, K = weight.shape
    assert C_in_w == C_in

    L_pad = L + 2 * padding
    L_conv = (L_pad - dilation * (K - 1) - 1) // stride + 1
    if causal:
        # Chomp1d removes `padding` elements from the right.
        assert padding > 0, "causal=True with padding=0 yields an empty tensor in PyTorch"
        L_out = L_conv - padding
    else:
        L_out = L_conv
    assert L_out > 0

    KC = K * C_in

    # Length tiling: L_out lives on the 128-lane axis of the output block.
    TL = L_out if L_out <= tile_l else tile_l        # tile_l is a multiple of 128
    T = -(-L_out // TL)                              # number of length tiles
    # Static width of the x window one output tile needs (all K taps).
    W = (TL - 1) * stride + dilation * (K - 1) + 1

    # Fused tap weights: w_fused[o, k*C_in + c] = weight[o, c, k]  -> (C_out, K*C_in)
    w_fused = jnp.transpose(weight, (0, 2, 1)).reshape(C_out, KC).astype(compute_dtype)
    b_2d = bias.astype(jnp.float32).reshape(C_out, 1)
    out_dtype = x.dtype

    def kernel(x_ref, w_ref, b_ref, o_ref, win_ref):
        # x_ref  : (C_in, L)        current-batch row (original dtype); its block
        #                           index ignores t, so it is DMA'd once per batch.
        # w_ref  : (C_out, K*C_in)  fused tap weights (compute dtype)
        # b_ref  : (C_out, 1)       f32 bias
        # o_ref  : (C_out, TL)      output tile, length lane-dense
        # win_ref: (T, C_in, W)     zero-padded per-tile x windows (compute dtype)
        t = pl.program_id(1)

        # Build all per-tile windows once per batch (t == 0).  Every slice here
        # is static, so no dynamic lane-offset loads are needed later.  The
        # causal left zero-padding (and any right padding) is produced here in
        # VMEM instead of via a jnp.pad copy of x in HBM.
        @pl.when(t == 0)
        def _():
            for tt in range(T):                        # static unroll (T is small)
                o_tt = tt * TL * stride - padding      # x-coordinate of window col 0
                lo = max(0, -o_tt)
                hi = min(W, L - o_tt)
                if lo > 0 or hi < W:                   # edge window: needs zeros
                    win_ref[tt] = jnp.zeros((C_in, W), compute_dtype)
                if hi > lo:
                    win_ref[tt, :, lo:hi] = (
                        x_ref[:, o_tt + lo:o_tt + hi].astype(compute_dtype))

        win = win_ref[t]                               # (C_in, W)
        taps = []
        for k in range(K):                             # K is small & static
            j0 = k * dilation
            if stride == 1:
                taps.append(win[:, j0:j0 + TL])
            else:
                # TODO(synk): stride>1 is not exercised by the standard TCN
                # configuration (stride=1); this strided slice path is untested.
                taps.append(win[:, j0:j0 + (TL - 1) * stride + 1:stride])
        xstack = jnp.concatenate(taps, axis=0)         # (K*C_in, TL)

        # Single fused MXU contraction over K*C_in, f32 accumulation.
        acc = jnp.dot(w_ref[...], xstack, preferred_element_type=jnp.float32)
        o_ref[...] = (acc + b_ref[...]).astype(o_ref.dtype)

    out = pl.pallas_call(
        kernel,
        out_shape=jax.ShapeDtypeStruct((N, C_out, L_out), out_dtype),
        grid=(N, T),
        in_specs=[
            pl.BlockSpec((pl.Squeezed(), C_in, L), lambda n, t: (n, 0, 0)),
            pl.BlockSpec((C_out, KC), lambda n, t: (0, 0)),
            pl.BlockSpec((C_out, 1), lambda n, t: (0, 0)),
        ],
        out_specs=pl.BlockSpec((pl.Squeezed(), C_out, TL), lambda n, t: (n, 0, t)),
        scratch_shapes=[pltpu.VMEM((T, C_in, W), compute_dtype)],
        # Batch axis is megacore-parallel; the L-tile axis must stay
        # "arbitrary" because the window scratch is filled at t == 0.
        compiler_params=pltpu.CompilerParams(
            dimension_semantics=("parallel", "arbitrary")),
    )(x, w_fused, b_2d)

    # TODO(synk): for very large C_in*L the per-batch row + window scratch is
    # O(C_in*L) of VMEM; a manual halo DMA (memory_space=pl.ANY) would stream it.
    return out


def reference_causal_conv1d(x, weight, bias, *, stride, dilation, padding, causal=True):
    """Pure-JAX reference mirroring torch.nn.Conv1d + Chomp1d."""
    out = jax.lax.conv_general_dilated(
        x, weight,
        window_strides=(stride,),
        padding=[(padding, padding)],
        rhs_dilation=(dilation,),
        dimension_numbers=("NCH", "OIH", "NCH"),
    )
    out = out + bias[None, :, None]
    if causal and padding > 0:
        out = out[:, :, :-padding]
    return out


if __name__ == "__main__":
    # Module hyper-parameters (typical TCN layer).
    n_inputs, n_outputs = 4, 8
    kernel_size, stride, dilation = 3, 1, 2
    padding = (kernel_size - 1) * dilation        # causal padding = 4
    batch, length = 2, 16

    # Deterministic parameter / input construction (synthetic, no checkpoint).
    key = jax.random.PRNGKey(0)
    kx, kw, kb = jax.random.split(key, 3)
    x = jax.random.normal(kx, (batch, n_inputs, length), dtype=jnp.float32)
    weight = jax.random.normal(kw, (n_outputs, n_inputs, kernel_size), dtype=jnp.float32) * 0.1
    bias = jax.random.normal(kb, (n_outputs,), dtype=jnp.float32) * 0.1

    ref = reference_causal_conv1d(
        x, weight, bias, stride=stride, dilation=dilation, padding=padding, causal=True
    )

    # f32 MXU operands: checks the algorithm (padding/chomp/fused taps) exactly.
    run_f32 = functools.partial(
        causal_conv1d, stride=stride, dilation=dilation, padding=padding,
        causal=True, compute_dtype=jnp.float32)
    out_f32 = jax.block_until_ready(jax.jit(run_f32)(x, weight, bias))
    assert out_f32.shape == (batch, n_outputs, length), out_f32.shape
    assert jnp.allclose(out_f32, ref, atol=1e-5, rtol=1e-5), \
        float(jnp.max(jnp.abs(out_f32 - ref)))

    # Default bf16-operand / f32-accumulate path (perf configuration): looser tol.
    run_bf16 = functools.partial(
        causal_conv1d, stride=stride, dilation=dilation, padding=padding, causal=True)
    out_bf16 = jax.block_until_ready(jax.jit(run_bf16)(x, weight, bias))
    assert out_bf16.shape == (batch, n_outputs, length), out_bf16.shape
    assert jnp.allclose(out_bf16, ref, atol=5e-2, rtol=5e-2), \
        float(jnp.max(jnp.abs(out_bf16 - ref)))

    print("KERNEL_OK")
</pallas_src>

<mosaic_0001>
module attributes {stable_mosaic.version = 11 : i64} {
  func.func @kernel(%arg0: i32, %arg1: i32, %arg2: memref<1x4x16xf32, #tpu.memory_space<vmem>>, %arg3: memref<8x12xf32, #tpu.memory_space<vmem>>, %arg4: memref<8x1xf32, #tpu.memory_space<vmem>>, %arg5: memref<1x8x16xf32, #tpu.memory_space<vmem>>, %arg6: memref<1x4x20xf32, #tpu.memory_space<vmem>>) attributes {dimension_semantics = [#tpu.dimension_semantics<parallel>, #tpu.dimension_semantics<arbitrary>], iteration_bounds = array<i64: 2, 1>, scalar_prefetch = 0 : i64, scratch_operands = 1 : i64, tpu.core_type = #tpu.core_type<tc>, window_params = [{transform_indices = @transform_0, window_bounds = array<i64: 1, 4, 16>}, {pipeline_mode = #tpu.pipeline_mode<synchronous>, transform_indices = @transform_1, window_bounds = array<i64: 8, 12>}, {pipeline_mode = #tpu.pipeline_mode<synchronous>, transform_indices = @transform_2, window_bounds = array<i64: 8, 1>}, {transform_indices = @transform_3, window_bounds = array<i64: 1, 8, 16>}]} {
    %c0_i32 = arith.constant 0 : i32
    %0 = arith.cmpi eq, %arg1, %c0_i32 : i32
    %1 = arith.extui %0 : i1 to i32
    %c0_i32_0 = arith.constant 0 : i32
    %2 = arith.cmpi ne, %1, %c0_i32_0 : i32
    scf.if %2 {
      %cst_9 = arith.constant 0.000000e+00 : f32
      %18 = vector.broadcast %cst_9 : f32 to vector<4x20xf32>
      %c0_10 = arith.constant 0 : index
      %c0_11 = arith.constant 0 : index
      %c0_12 = arith.constant 0 : index
      %19 = vector.load %arg6[%c0_10, %c0_11, %c0_12] : memref<1x4x20xf32, #tpu.memory_space<vmem>>, vector<1x4x20xf32>
      %20 = vector.shape_cast %19 : vector<1x4x20xf32> to vector<4x20xf32>
      %21 = vector.shape_cast %18 : vector<4x20xf32> to vector<1x4x20xf32>
      tpu.vector_store %arg6[%c0_10, %c0_11, %c0_12], %21 {strides = array<i32>} : memref<1x4x20xf32, #tpu.memory_space<vmem>>, vector<1x4x20xf32>,
      %c0_13 = arith.constant 0 : index
      %c0_14 = arith.constant 0 : index
      %c0_15 = arith.constant 0 : index
      %22 = vector.load %arg2[%c0_13, %c0_14, %c0_15] : memref<1x4x16xf32, #tpu.memory_space<vmem>>, vector<1x4x16xf32>
      %23 = vector.shape_cast %22 : vector<1x4x16xf32> to vector<4x16xf32>
      %c0_16 = arith.constant 0 : index
      %c0_17 = arith.constant 0 : index
      %c4 = arith.constant 4 : index
      %24 = vector.load %arg6[%c0_16, %c0_17, %c4] : memref<1x4x20xf32, #tpu.memory_space<vmem>>, vector<1x4x16xf32>
      %25 = vector.shape_cast %24 : vector<1x4x16xf32> to vector<4x16xf32>
      %26 = vector.shape_cast %23 : vector<4x16xf32> to vector<1x4x16xf32>
      tpu.vector_store %arg6[%c0_16, %c0_17, %c4], %26 {strides = array<i32>} : memref<1x4x20xf32, #tpu.memory_space<vmem>>, vector<1x4x16xf32>,
    } else {
    }
    %3 = arith.index_cast %arg1 : i32 to index
    %c0 = arith.constant 0 : index
    %c0_1 = arith.constant 0 : index
    %4 = vector.load %arg6[%3, %c0, %c0_1] : memref<1x4x20xf32, #tpu.memory_space<vmem>>, vector<1x4x20xf32>
    %5 = vector.shape_cast %4 : vector<1x4x20xf32> to vector<4x20xf32>
    %6 = vector.extract_strided_slice %5 {offsets = [0, 0], sizes = [4, 16], strides = [1, 1]} : vector<4x20xf32> to vector<4x16xf32>
    %7 = vector.extract_strided_slice %5 {offsets = [0, 2], sizes = [4, 16], strides = [1, 1]} : vector<4x20xf32> to vector<4x16xf32>
    %8 = vector.extract_strided_slice %5 {offsets = [0, 4], sizes = [4, 16], strides = [1, 1]} : vector<4x20xf32> to vector<4x16xf32>
    %9 = tpu.concatenate %6, %7, %8 in 0 : vector<4x16xf32>, vector<4x16xf32>, vector<4x16xf32> -> vector<12x16xf32>
    %c0_2 = arith.constant 0 : index
    %c0_3 = arith.constant 0 : index
    %10 = vector.load %arg3[%c0_2, %c0_3] : memref<8x12xf32, #tpu.memory_space<vmem>>, vector<8x12xf32>
    %cst = arith.constant dense<0.000000e+00> : vector<8x16xf32>
    %11 = tpu.matmul %10, %9, %cst {dimension_numbers = #tpu.dot_dimension_numbers<[1], [0], [0], [1], [0, 0, 1, 1], [], []>} : vector<8x12xf32>, vector<12x16xf32>, vector<8x16xf32> -> vector<8x16xf32>
    %c0_4 = arith.constant 0 : index
    %c0_5 = arith.constant 0 : index
    %12 = vector.load %arg4[%c0_4, %c0_5] : memref<8x1xf32, #tpu.memory_space<vmem>>, vector<8x1xf32>
    %13 = vector.broadcast %12 : vector<8x1xf32> to vector<8x16xf32>
    %14 = arith.addf %11, %13 : vector<8x16xf32>
    %c0_6 = arith.constant 0 : index
    %c0_7 = arith.constant 0 : index
    %c0_8 = arith.constant 0 : index
    %15 = vector.load %arg5[%c0_6, %c0_7, %c0_8] : memref<1x8x16xf32, #tpu.memory_space<vmem>>, vector<1x8x16xf32>
    %16 = vector.shape_cast %15 : vector<1x8x16xf32> to vector<8x16xf32>
    %17 = vector.shape_cast %14 : vector<8x16xf32> to vector<1x8x16xf32>
    tpu.vector_store %arg5[%c0_6, %c0_7, %c0_8], %17 {strides = array<i32>} : memref<1x8x16xf32, #tpu.memory_space<vmem>>, vector<1x8x16xf32>,
    return
  }
  func.func @transform_0(%arg0: i32, %arg1: i32) -> (i32, i32, i32) {
    %c0_i32 = arith.constant 0 : i32
    %c0_i32_0 = arith.constant 0 : i32
    %c0_i32_1 = arith.constant 0 : i32
    return %arg0, %c0_i32, %c0_i32_0 : i32, i32, i32
  }
  func.func @transform_1(%arg0: i32, %arg1: i32) -> (i32, i32) {
    %c0_i32 = arith.constant 0 : i32
    %c0_i32_0 = arith.constant 0 : i32
    %c0_i32_1 = arith.constant 0 : i32
    return %c0_i32, %c0_i32_0 : i32, i32
  }
  func.func @transform_2(%arg0: i32, %arg1: i32) -> (i32, i32) {
    %c0_i32 = arith.constant 0 : i32
    %c0_i32_0 = arith.constant 0 : i32
    %c0_i32_1 = arith.constant 0 : i32
    return %c0_i32, %c0_i32_0 : i32, i32
  }
  func.func @transform_3(%arg0: i32, %arg1: i32) -> (i32, i32, i32) {
    %c0_i32 = arith.constant 0 : i32
    %c0_i32_0 = arith.constant 0 : i32
    return %arg0, %c0_i32, %arg1 : i32, i32, i32
  }
}

</mosaic_0001>

<llo_original>
// kernel: causal_conv1d.1
$region0: #{causal_conv1d.1}
  #allocation0 [shape = 'u32[]', space=smem, size = 0x4, offset = 0x4, fixed_abs, tag = 'smem constant byte address 0x4 - core index']
  #allocation1 [shape = 'u32[144,128]{1,0:T(1,128)}', space=vmem, size = 0x12000, scoped, tag = 'internal scratch']
  #allocation2 [shape = 'f32[1,4,20]{2,1,0:T(4,128)}', space=vmem, size = 0x800, scoped, tag = 'scratch operand']
  %s0 = inlined_call_operand.vmem [shape: f32[2,4,16], index: 0, kind: input, shape index: {}]
  %s1 = inlined_call_operand.vmem [shape: f32[8,12], index: 1, kind: input, shape index: {}]
  %s2 = inlined_call_operand.vmem [shape: f32[8,1], index: 2, kind: input, shape index: {}]
  %s3 = inlined_call_operand.hbm [shape: f32[2,8,16], index: 3, kind: output, shape index: {}]
  %s4 = sld [smem:[#allocation0]]
  $region49: #{causal_conv1d.1} parent=0
    _
  %s6 = ssub.s32 1, %s4
  %s7 = scalar_select 0, %s6, %s4
  $region1: #{causal_conv1d.1} parent=0
    #allocation3 [shape = 'u8[8192]{0}', space=vmem, size = 0x2000, scoped, tag = 'output window, operand 0']
    #allocation4 [shape = 's32[2]{0}', space=sflag, size = 0x8, scoped, tag = 'scoped memory for causal_conv1d.1']
    %8 = vsyncpa [#allocation4], 0
    %s9 = scalar_lea.sflag [#allocation4], 1
    %10 = vsyncpa %s9, 0
    loop: start=0, step=1, limit=4
    $region2: #{causal_conv1d.1} parent=1 // loop_pre_header
      _
    $region3: #{causal_conv1d.1} parent=1 // loop_header
      %s12 = sphi 0, %s16
      %p13 = scmp.ge.s32.totalorder %s12, 4
      %s19 = sphi 0, %s31
      %s20 = sphi 0, %s27
      %s21 = sphi 0, %s19
      %s22 = sphi 0, %s20
      %s23 = sphi 0, %s21
      %s24 = sphi 0, %s22
      %s34 = sphi 0, %s36
      %s37 = sphi 0, %s34
      %s38 = sphi 0, %s37
      %s54 = sphi 0, %s38
      %s58 = sphi 0, %s58
      %s60 = sphi 0, %s58
      %s61 = sphi 0, %s60
      %s75 = sphi 0, %s61
      %s79 = sphi 0, %s79
      %s81 = sphi 0, %s79
      %s82 = sphi 0, %s81
      %s96 = sphi 0, %s82
      %s104 = sphi 0, %s106
      %s107 = sphi 0, %s104
      %s108 = sphi 0, %s107
      %s124 = sphi 0, %s108
    $region4: #{causal_conv1d.1} parent=1 // loop_header_branch
      %15 = sbr.rel (%p13) target = $region8
    $region5: #{causal_conv1d.1} parent=1 // loop_body
      %s17 = ssub.s32 %s12, 1
      %s18 = ssub.s32 %s12, 2
      %s25 = sadd.s32 1, %s20
      %p26 = scmp.ge.s32.totalorder %s25, 1
      %s27 = scalar_select %p26, 0, %s25
      %s28 = sadd.s32 1, %s19
      %s29 = scalar_select %p26, %s28, %s19
      %p30 = scmp.ge.s32.totalorder %s29, 2
      %s31 = scalar_select %p30, 0, %s29
      %s32 = ssub.s32 %s19, %s31
      %p33 = scmp.eq.s32.totalorder %s32, 0
      %s35 = sadd.s32 %s34, 1
      %s36 = scalar_select %p33, %s34, %s35
      %p39 = pneg %p33
      %p40 = scmp.eq.s32.totalorder %s12, 1
      %p41 = por %p39, %p40
      %p42 = scmp.ne.s32.totalorder %s34, %s37
      %p43 = scmp.eq.s32.totalorder %s12, 0
      %p44 = por %p42, %p43
      %p45 = scmp.ne.s32.totalorder %s34, %s37
      %p46 = scmp.eq.s32.totalorder %s17, 1
      %p47 = por %p45, %p46
      %p48 = scmp.ne.s32.totalorder %s37, %s38
      %p49 = scmp.eq.s32.totalorder %s17, 0
      %p50 = por %p48, %p49
      %p51 = scmp.ne.s32.totalorder %s37, %s38
      %p52 = scmp.eq.s32.totalorder %s18, 1
      %p53 = por %p51, %p52
      %p55 = scmp.ne.s32.totalorder %s38, %s54
      %p56 = scmp.eq.s32.totalorder %s18, 0
      %p57 = por %p55, %p56
      %s59 = sadd.s32 %s58, 1
      %p62 = scmp.eq.s32.totalorder %s12, 1
      %p63 = scmp.ne.s32.totalorder %s58, %s60
      %p64 = scmp.eq.s32.totalorder %s12, 0
      %p65 = por %p63, %p64
      %p66 = scmp.ne.s32.totalorder %s58, %s60
      %p67 = scmp.eq.s32.totalorder %s17, 1
      %p68 = por %p66, %p67
      %p69 = scmp.ne.s32.totalorder %s60, %s61
      %p70 = scmp.eq.s32.totalorder %s17, 0
      %p71 = por %p69, %p70
      %p72 = scmp.ne.s32.totalorder %s60, %s61
      %p73 = scmp.eq.s32.totalorder %s18, 1
      %p74 = por %p72, %p73
      %p76 = scmp.ne.s32.totalorder %s61, %s75
      %p77 = scmp.eq.s32.totalorder %s18, 0
      %p78 = por %p76, %p77
      %s80 = sadd.s32 %s79, 1
      %p83 = scmp.eq.s32.totalorder %s12, 1
      %p84 = scmp.ne.s32.totalorder %s79, %s81
      %p85 = scmp.eq.s32.totalorder %s12, 0
      %p86 = por %p84, %p85
      %p87 = scmp.ne.s32.totalorder %s79, %s81
      %p88 = scmp.eq.s32.totalorder %s17, 1
      %p89 = por %p87, %p88
      %p90 = scmp.ne.s32.totalorder %s81, %s82
      %p91 = scmp.eq.s32.totalorder %s17, 0
      %p92 = por %p90, %p91
      %p93 = scmp.ne.s32.totalorder %s81, %s82
      %p94 = scmp.eq.s32.totalorder %s18, 1
      %p95 = por %p93, %p94
      %p97 = scmp.ne.s32.totalorder %s82, %s96
      %p98 = scmp.eq.s32.totalorder %s18, 0
      %p99 = por %p97, %p98
      %s100 = ssub.s32 %s19, %s31
      %s101 = ssub.s32 %s20, %s27
      %s102 = sor.u32 %s100, %s101
      %p103 = scmp.eq.s32.totalorder %s102, 0
      %s105 = sadd.s32 %s104, 1
      %s106 = scalar_select %p103, %s104, %s105
      %p109 = pneg %p103
      %p110 = scmp.eq.s32.totalorder %s12, 1
      %p111 = por %p109, %p110
      %p112 = scmp.ne.s32.totalorder %s104, %s107
      %p113 = scmp.eq.s32.totalorder %s12, 0
      %p114 = por %p112, %p113
      %p115 = scmp.ne.s32.totalorder %s104, %s107
      %p116 = scmp.eq.s32.totalorder %s17, 1
      %p117 = por %p115, %p116
      %p118 = scmp.ne.s32.totalorder %s107, %s108
      %p119 = scmp.eq.s32.totalorder %s17, 0
      %p120 = por %p118, %p119
      %p121 = scmp.ne.s32.totalorder %s107, %s108
      %p122 = scmp.eq.s32.totalorder %s18, 1
      %p123 = por %p121, %p122
      %p125 = scmp.ne.s32.totalorder %s108, %s124
      %p126 = scmp.eq.s32.totalorder %s18, 0
      %p127 = por %p125, %p126
      %p128 = scmp.le.s32.totalorder 1, %s12
      %p129 = scmp.lt.s32.totalorder %s12, 3
      %p130 = pnand %p128, %p129
      %p131 = pneg %p130
      // Predicated region
      $region9: #{causal_conv1d.1} parent=5 // pred_check
        _
      $region10: #{causal_conv1d.1} parent=5 // pred_check_branch
        %133 = sbr.rel (%p130) target = $region12
      $region11: #{causal_conv1d.1} parent=5 // pred_region
        %s134 = ssub.s32 %s12, 1
        // Predicated region
        $region13: #{causal_conv1d.1} parent=11 // pred_check
          %p135 = pneg %p71
        $region14: #{causal_conv1d.1} parent=11 // pred_check_branch
          %137 = sbr.rel (%p135) target = $region16
        $region15: #{causal_conv1d.1} parent=11 // pred_region
          _
        $region16: #{causal_conv1d.1} parent=11 // pred_fallthru
          _
        // Predicated region
        $region17: #{causal_conv1d.1} parent=11 // pred_check
          %p138 = pneg %p92
        $region18: #{causal_conv1d.1} parent=11 // pred_check_branch
          %140 = sbr.rel (%p138) target = $region20
        $region19: #{causal_conv1d.1} parent=11 // pred_region
          _
        $region20: #{causal_conv1d.1} parent=11 // pred_fallthru
          _
      $region12: #{causal_conv1d.1} parent=5 // pred_fallthru
        _
      %p141 = scmp.lt.s32.totalorder %s12, 2
      // Predicated region
      $region21: #{causal_conv1d.1} parent=5 // pred_check
        %p142 = pneg %p141
      $region22: #{causal_conv1d.1} parent=5 // pred_check_branch
        %144 = sbr.rel (%p142) target = $region24
      $region23: #{causal_conv1d.1} parent=5 // pred_region
        // Predicated region
        $region25: #{causal_conv1d.1} parent=23 // pred_check
          %p145 = pneg %p44
        $region26: #{causal_conv1d.1} parent=23 // pred_check_branch
          %147 = sbr.rel (%p145) target = $region28
        $region27: #{causal_conv1d.1} parent=23 // pred_region
          %p148 = scmp.lt.s32.totalorder %s19, 1
          %s149 = scalar_select %p148, %s19, 1
          %s150 = smul.addr %s149, 4
          %s151 = scalar_lea.vmem %s0, %s150
        $region28: #{causal_conv1d.1} parent=23 // pred_fallthru
          _
      $region24: #{causal_conv1d.1} parent=5 // pred_fallthru
        _
      %p152 = scmp.le.s32.totalorder 1, %s12
      %p153 = scmp.lt.s32.totalorder %s12, 3
      %p154 = pnand %p152, %p153
      %p155 = pneg %p154
      // Predicated region
      $region29: #{causal_conv1d.1} parent=5 // pred_check
        _
      $region30: #{causal_conv1d.1} parent=5 // pred_check_branch
        %157 = sbr.rel (%p154) target = $region32
      $region31: #{causal_conv1d.1} parent=5 // pred_region
        %s158 = ssub.s32 %s12, 1
        %p159 = scmp.lt.s32.totalorder %s21, 1
        %s160 = scalar_select %p159, %s21, 1
        %s161 = smul.addr %s160, 4
        %s162 = scalar_lea.vmem %s0, %s161
        %p163 = pneg %p50
        %p164 = pneg %p47
        %p165 = pneg %p71
        %p166 = pneg %p68
        %p167 = pneg %p92
        %p168 = pneg %p89
        %p169 = pneg %p120
        %p170 = pneg %p117
        %s171 = sand.u32 %s107, 1
        %s172 = scalar_lea.sflag [#allocation4], %s171
        %s173 = sand.u32 %s107, 1
        %s174 = smul.addr %s173, 8
        %s175 = scalar_lea.vmem [#allocation3], %s174
        %p176 = scmp.lt.s32.totalorder %s21, 1
        %s177 = scalar_select %p176, %s21, 1
        %s178 = smul.addr %s177, 4
        %s179 = scalar_lea.vmem %s0, %s178
        %p180 = scmp.eq.s32.totalorder %s22, 0
        // Predicated region
        $region33: #{causal_conv1d.1} parent=31 // pred_check
          %p181 = pneg %p180
        $region34: #{causal_conv1d.1} parent=31 // pred_check_branch
          %183 = sbr.rel (%p181) target = $region36
        $region35: #{causal_conv1d.1} parent=31 // pred_region
          %vm184 = vcmask 158720
          %185 = vst.msk [vmem:[#allocation2] sm:$0xf] %vm184, 0.0
          %v186 = vld [vmem:[%s179] sm:$0xf]
          %188 = vrot.lane.b32.xlu0 %v186, 4
          %v189 = vpop.permute.xlu0 %188
          %vm191 = vcmask 158752
          %192 = vst.msk [vmem:[#allocation2] sm:$0xf] %vm191, %v189
        $region36: #{causal_conv1d.1} parent=31 // pred_fallthru
          _
        %s193 = smul.u32 %s22, 4
        %s194 = scalar_lea.vmem [#allocation2], %s193
        %v195 = vld [vmem:[%s194] sm:$0xf]
        %v197 = vrot.slane %v195, 4
        %198 = vrot.lane.b32.xlu0 %v197, 126
        %v199 = vpop.permute.xlu0 %198
        %201 = vrot.lane.b32.xlu0 %v195, 124
        %v202 = vpop.permute.xlu0 %201
        %vm203 = vcmask 1043456
        %v204 = vsel %vm203, %v195, %v199
        %v205 = vld [vmem:[%s1] sm:$0xff]
        %v206 = vld [vmem:[%s2] sm:$0xff]
        %208 = vset.pattern.permute.xlu0 0
        %209 = vperm.xlu0 %208, %v206
        %v210 = vpop.permute.xlu0 %209
        %vm212 = vcmask 97280
        %v214 = vsel %vm212, %v205, 0
        %v216 = vsel %vm203, %v202, 0
        %218 = vmatprep.subr.mxu0 0.0
        %219 = vmatpush1.msra.mxu0 %v204
        %220 = vmatprep.subr.mxu0 0.0
        %221 = vmatpush1.msra.mxu0 %v216
        %222 = vmatprep.subr.mxu0 0.0
        %223 = vmatpush1.msra.mxu0 0.0
        %224 = vmatprep.subr.mxu0 0.0
        %225 = vmatpush1.msra.mxu0 0.0
        %226 = vmatprep.subr.mxu0 0.0
        %227 = vmatpush1.msra.mxu0 0.0
        %228 = vmatprep.subr.mxu0 0.0
        %229 = vmatpush1.msra.mxu0 0.0
        %230 = vmatprep.subr.mxu0 0.0
        %231 = vmatpush1.msra.mxu0 0.0
        %232 = vmatprep.subr.mxu0 0.0
        %233 = vmatpush1.msra.mxu0 0.0
        %234 = vmatprep.subr.mxu0 0.0
        %235 = vmatpush1.msra.mxu0 0.0
        %236 = vmatprep.subr.mxu0 0.0
        %237 = vmatpush1.msra.mxu0 0.0
        %238 = vmatprep.subr.mxu0 0.0
        %239 = vmatpush1.msra.mxu0 0.0
        %240 = vmatprep.subr.mxu0 0.0
        %241 = vmatpush1.msra.mxu0 0.0
        %242 = vmatprep.subr.mxu0 0.0
        %243 = vmatpush1.msra.mxu0 0.0
        %244 = vmatprep.subr.mxu0 0.0
        %245 = vmatpush1.msra.mxu0 0.0
        %246 = vmatprep.subr.mxu0 0.0
        %247 = vmatpush1.msra.mxu0 0.0
        %248 = vmatprep.subr.mxu0 0.0
        %249 = vmatpush1.msra.mxu0 0.0
        %250 = vmatprep.subr.mxu0 0.0
        %251 = vmatpush1.msra.mxu0 0.0
        %252 = vmatprep.subr.mxu0 0.0
        %253 = vmatpush1.msra.mxu0 0.0
        %254 = vmatprep.subr.mxu0 0.0
        %255 = vmatpush1.msra.mxu0 0.0
        %256 = vmatprep.subr.mxu0 0.0
        %257 = vmatpush1.msra.mxu0 0.0
        %258 = vmatprep.subr.mxu0 0.0
        %259 = vmatpush1.msra.mxu0 0.0
        %260 = vmatprep.subr.mxu0 0.0
        %261 = vmatpush1.msra.mxu0 0.0
        %262 = vmatprep.subr.mxu0 0.0
        %263 = vmatpush1.msra.mxu0 0.0
        %264 = vmatprep.subr.mxu0 0.0
        %265 = vmatpush1.msra.mxu0 0.0
        %266 = vmatprep.subr.mxu0 0.0
        %267 = vmatpush1.msra.mxu0 0.0
        %268 = vmatprep.subr.mxu0 0.0
        %269 = vmatpush1.msra.mxu0 0.0
        %270 = vmatprep.subr.mxu0 0.0
        %271 = vmatpush1.msra.mxu0 0.0
        %272 = vmatprep.subr.mxu0 0.0
        %273 = vmatpush1.msra.mxu0 0.0
        %274 = vmatprep.subr.mxu0 0.0
        %275 = vmatpush1.msra.mxu0 0.0
        %276 = vmatprep.subr.mxu0 0.0
        %277 = vmatpush1.msra.mxu0 0.0
        %278 = vmatprep.subr.mxu0 0.0
        %279 = vmatpush1.msra.mxu0 0.0
        %280 = vmatprep.subr.mxu0 0.0
        %281 = vmatpush1.msra.mxu0 0.0
        %282 = vmatprep.mubr.f32.mxu0 0.0
        %283 = vmatmul.mubr.f32.gmra.mrb[0].mxu0 %v214
        %v284 = vpop.f32.mrb[0].mxu0
        %v285 = vadd.f32 %v210, %v284
        %v286 = vpop.f32.mrb[0].mxu0
        %287 = vdwg.mxu0
        %vm288 = vcmask 130048
        %289 = vst.msk [vmem:[%s175] sm:$0xff] %vm288, %v285
        %s290 = sand.u32 %s107, 1
        %s291 = scalar_lea.sflag [#allocation4], %s290
        %s292 = sand.u32 %s107, 1
        %s293 = smul.addr %s292, 8
        %s294 = scalar_lea.vmem [#allocation3], %s293
        // Predicated region
        $region37: #{causal_conv1d.1} parent=31 // pred_check
          %p295 = pneg %p117
        $region38: #{causal_conv1d.1} parent=31 // pred_check_branch
          %297 = sbr.rel (%p295) target = $region40
        $region39: #{causal_conv1d.1} parent=31 // pred_region
          %s299 = ssub.s32 128, 128
          %300 = vsyncadd %s291, %s299
          %s301 = sadd.s32 %s22, %s21
          %s302 = smul.addr %s301, 128
          %s303 = scalar_lea.hbm %s3, %s302
          %s305 = sshll.u32 %s294, 4
          %s306 = int_to_ptr.vmem [resolvable:$true] %s305
          %308 = dma.vmem_to_hbm [thread:$0]  %s306, 128, %s303, %s291
        $region40: #{causal_conv1d.1} parent=31 // pred_fallthru
          _
      $region32: #{causal_conv1d.1} parent=5 // pred_fallthru
        _
      %p309 = scmp.le.s32.totalorder 2, %s12
      // Predicated region
      $region41: #{causal_conv1d.1} parent=5 // pred_check
        %p310 = pneg %p309
      $region42: #{causal_conv1d.1} parent=5 // pred_check_branch
        %312 = sbr.rel (%p310) target = $region44
      $region43: #{causal_conv1d.1} parent=5 // pred_region
        %s313 = ssub.s32 %s12, 2
        // Predicated region
        $region45: #{causal_conv1d.1} parent=43 // pred_check
          %p314 = pneg %p123
        $region46: #{causal_conv1d.1} parent=43 // pred_check_branch
          %316 = sbr.rel (%p314) target = $region48
        $region47: #{causal_conv1d.1} parent=43 // pred_region
          %s317 = sand.u32 %s108, 1
          %s318 = scalar_lea.sflag [#allocation4], %s317
          %s319 = sand.u32 %s108, 1
          %s320 = smul.addr %s319, 8
          %s321 = scalar_lea.vmem [#allocation3], %s320
          %322 = dma.done %s318, 128
        $region48: #{causal_conv1d.1} parent=43 // pred_fallthru
          _
      $region44: #{causal_conv1d.1} parent=5 // pred_fallthru
        _
    $region6: #{causal_conv1d.1} parent=1 // loop_footer
      %s16 = sadd.s32 1, %s12
    $region7: #{causal_conv1d.1} parent=1 // loop_footer_branch
      %11 = sbr.rel target = $region3
    $region8: #{causal_conv1d.1} parent=1 // loop_exit
      _
    %323 = vsyncpa [#allocation4], 1
    %s324 = scalar_lea.sflag [#allocation4], 1
    %325 = vsyncpa %s324, 1

</llo_original>
